<compile_context>
chip_gen: v5e
topology: v5e:2x2
jax: 0.10.0
libtpu: 0.0.40
codegen_flags: <defaults>
</compile_context>

<pallas_src>
import jax
import jax.numpy as jnp
from jax.experimental import pallas as pl
from jax.experimental.pallas import tpu as pltpu

# ----- hyper-params (config['IQL']) -----
ENCODER_DIM = 64          # encoder_dim
HIDDEN_DIM  = 128         # hidden_dim
N_HIDDEN    = 2           # n_hidden
ACT_DIM     = 8           # act_dim
ACT_PAD     = 128         # lane-dense padded action dim (sliced back to ACT_DIM)
MIN_LOG_STD = -5.0
MAX_LOG_STD = 2.0
BATCH       = 8


def gaussian_policy_kernel(obs_ref, w1_ref, b1_ref, w2_ref, b2_ref,
                           w3_ref, b3_ref, mean_ref):
    """One batch tile of the policy MLP head.

    Shapes:
      obs_ref  : (TB, 2E)       bf16  cat([img_emb, goal_img_emb - img_emb], axis=1)
      w1_ref   : (2E, H)        bf16 ; b1_ref : (1, H)       f32
      w2_ref   : (H, H)         bf16 ; b2_ref : (1, H)       f32
      w3_ref   : (H, ACT_PAD)   bf16 (zero-padded past ACT_DIM)
      b3_ref   : (1, ACT_PAD)   f32  (zero-padded past ACT_DIM)
      mean_ref : (TB, ACT_PAD)  f32  (cols >= ACT_DIM are junk-free zeros; sliced outside)
    """
    obs = obs_ref[...]

    # Layer 1: single K=128 MXU pass, bf16 inputs, f32 accumulate.
    h = jnp.dot(obs, w1_ref[...],
                preferred_element_type=jnp.float32) + b1_ref[...]
    h = jnp.maximum(h, 0.0)                                   # ReLU (f32, VPU)

    # Layer 2
    h = jnp.dot(h.astype(jnp.bfloat16), w2_ref[...],
                preferred_element_type=jnp.float32) + b2_ref[...]
    h = jnp.maximum(h, 0.0)                                   # ReLU

    # Output head (lane-dense, 128 columns; only the first ACT_DIM are real)
    mean = jnp.dot(h.astype(jnp.bfloat16), w3_ref[...],
                   preferred_element_type=jnp.float32) + b3_ref[...]

    # mean[:,0] = tanh(mean[:,0]) * 2 ; mean[:,1] = tanh(mean[:,1]) * 1
    col = jax.lax.broadcasted_iota(jnp.int32, mean.shape, 1)
    scale = jnp.where(col == 0, 2.0, 1.0)
    mean = jnp.where(col < 2, jnp.tanh(mean) * scale, mean)

    mean_ref[...] = mean                                      # unmasked 128-lane store


@jax.jit
def gaussian_policy_forward(img_emb, goal_img_emb, params):
    """Returns (mean, scale_tril) describing the MultivariateNormal."""
    B = img_emb.shape[0]
    two_e, H = 2 * ENCODER_DIM, HIDDEN_DIM

    # diff_goal + image_goal concat (detached embeddings in torch): done in the
    # wrapper so the kernel gets a single lane-dense (B, 128) bf16 operand.
    goal_diff = goal_img_emb - img_emb
    obs = jnp.concatenate([img_emb, goal_diff], axis=1).astype(jnp.bfloat16)

    # Pad the batch to a multiple of the tile so the (8,128) block constraint
    # always holds; tile capped at 256 rows (keeps double-buffered activation
    # blocks + resident weights far below every chip's scoped VMEM).
    Bp = max(8, ((B + 7) // 8) * 8)
    TB = Bp if Bp <= 256 else 256
    if Bp % TB != 0:
        Bp = ((Bp + TB - 1) // TB) * TB
    if Bp != B:
        obs = jnp.pad(obs, ((0, Bp - B), (0, 0)))
    grid = (Bp // TB,)

    full = lambda shape: pl.BlockSpec(shape, lambda i: (0, 0))   # weights stay resident

    mean_p = pl.pallas_call(
        gaussian_policy_kernel,
        out_shape=jax.ShapeDtypeStruct((Bp, ACT_PAD), jnp.float32),
        grid=grid,
        in_specs=[
            pl.BlockSpec((TB, two_e), lambda i: (i, 0)),      # obs, tiled over batch
            full((two_e, H)), full((1, H)),                   # layer 1
            full((H, H)),     full((1, H)),                   # layer 2
            full((H, ACT_PAD)), full((1, ACT_PAD)),           # output head (padded)
        ],
        out_specs=pl.BlockSpec((TB, ACT_PAD), lambda i: (i, 0)),
        compiler_params=pltpu.CompilerParams(
            dimension_semantics=("parallel",)),               # batch tiles are independent
    )(obs,
      params["w1"], params["b1"],
      params["w2"], params["b2"],
      params["w3p"], params["b3p"])

    mean = mean_p[:B, :ACT_DIM]                               # drop batch + lane padding

    # std depends only on log_std (not on the batch) -> computed outside the kernel.
    std = jnp.exp(MIN_LOG_STD
                  + jax.nn.sigmoid(params["log_std"]) * (MAX_LOG_STD - MIN_LOG_STD))
    scale_tril = jnp.diag(std)
    # TODO(synk): torch.distributions.MultivariateNormal (sampling / log_prob)
    # is host-side glue, not part of the kernel; we return (mean, scale_tril).
    return mean, scale_tril


def init_params(key):
    ks = jax.random.split(key, 3)
    E, H, A = ENCODER_DIM, HIDDEN_DIM, ACT_DIM

    def lin(k, fan_in, shape):
        return jax.random.normal(k, shape, jnp.float32) / jnp.sqrt(fan_in)

    w1 = lin(ks[0], 2 * E, (2 * E, H))
    w2 = lin(ks[1], H, (H, H))
    w3 = lin(ks[2], H, (H, A))

    # Lane-dense zero-padding of the output head to ACT_PAD columns.
    w3p = jnp.zeros((H, ACT_PAD), jnp.float32).at[:, :A].set(w3)
    b3p = jnp.zeros((1, ACT_PAD), jnp.float32)

    return {
        # bf16 weights (f32 accumulation inside the kernel's dots); biases f32.
        "w1": w1.astype(jnp.bfloat16),
        "w2": w2.astype(jnp.bfloat16),
        "w3p": w3p.astype(jnp.bfloat16),
        "b1": jnp.zeros((1, H), jnp.float32),
        "b2": jnp.zeros((1, H), jnp.float32),
        "b3p": b3p,
        # revind=False -> log_std initialized to zeros, learnable in torch.
        "log_std": jnp.zeros((A,), jnp.float32),
    }


if __name__ == "__main__":
    key = jax.random.PRNGKey(0)
    k_p, k_i, k_g = jax.random.split(key, 3)
    params = init_params(k_p)
    img_emb      = jax.random.normal(k_i, (BATCH, ENCODER_DIM), jnp.float32)
    goal_img_emb = jax.random.normal(k_g, (BATCH, ENCODER_DIM), jnp.float32)

    mean, scale_tril = gaussian_policy_forward(img_emb, goal_img_emb, params)
    jax.block_until_ready((mean, scale_tril))

    assert mean.shape == (BATCH, ACT_DIM)
    assert scale_tril.shape == (ACT_DIM, ACT_DIM)
    assert bool(jnp.all(jnp.isfinite(mean)))
    print("KERNEL_OK")
</pallas_src>

<mosaic_0001>
module attributes {stable_mosaic.version = 11 : i64} {
  func.func @gaussian_policy_kernel(%arg0: i32, %arg1: memref<8x128xbf16, #tpu.memory_space<vmem>>, %arg2: memref<128x128xbf16, #tpu.memory_space<vmem>>, %arg3: memref<1x128xf32, #tpu.memory_space<vmem>>, %arg4: memref<128x128xbf16, #tpu.memory_space<vmem>>, %arg5: memref<1x128xf32, #tpu.memory_space<vmem>>, %arg6: memref<128x128xbf16, #tpu.memory_space<vmem>>, %arg7: memref<1x128xf32, #tpu.memory_space<vmem>>, %arg8: memref<8x128xf32, #tpu.memory_space<vmem>>) attributes {dimension_semantics = [#tpu.dimension_semantics<parallel>], iteration_bounds = array<i64: 1>, scalar_prefetch = 0 : i64, scratch_operands = 0 : i64, tpu.core_type = #tpu.core_type<tc>, window_params = [{transform_indices = @transform_0, window_bounds = array<i64: 8, 128>}, {pipeline_mode = #tpu.pipeline_mode<synchronous>, transform_indices = @transform_1, window_bounds = array<i64: 128, 128>}, {pipeline_mode = #tpu.pipeline_mode<synchronous>, transform_indices = @transform_2, window_bounds = array<i64: 1, 128>}, {pipeline_mode = #tpu.pipeline_mode<synchronous>, transform_indices = @transform_3, window_bounds = array<i64: 128, 128>}, {pipeline_mode = #tpu.pipeline_mode<synchronous>, transform_indices = @transform_4, window_bounds = array<i64: 1, 128>}, {pipeline_mode = #tpu.pipeline_mode<synchronous>, transform_indices = @transform_5, window_bounds = array<i64: 128, 128>}, {pipeline_mode = #tpu.pipeline_mode<synchronous>, transform_indices = @transform_6, window_bounds = array<i64: 1, 128>}, {transform_indices = @transform_7, window_bounds = array<i64: 8, 128>}]} {
    %c0 = arith.constant 0 : index
    %c0_0 = arith.constant 0 : index
    %0 = vector.load %arg1[%c0, %c0_0] : memref<8x128xbf16, #tpu.memory_space<vmem>>, vector<8x128xbf16>
    %c0_1 = arith.constant 0 : index
    %c0_2 = arith.constant 0 : index
    %1 = vector.load %arg2[%c0_1, %c0_2] : memref<128x128xbf16, #tpu.memory_space<vmem>>, vector<128x128xbf16>
    %cst = arith.constant dense<0.000000e+00> : vector<8x128xf32>
    %2 = tpu.matmul %0, %1, %cst {dimension_numbers = #tpu.dot_dimension_numbers<[1], [0], [0], [1], [0, 0, 1, 1], [], []>} : vector<8x128xbf16>, vector<128x128xbf16>, vector<8x128xf32> -> vector<8x128xf32>
    %c0_3 = arith.constant 0 : index
    %c0_4 = arith.constant 0 : index
    %3 = vector.load %arg3[%c0_3, %c0_4] : memref<1x128xf32, #tpu.memory_space<vmem>>, vector<1x128xf32>
    %4 = vector.broadcast %3 : vector<1x128xf32> to vector<8x128xf32>
    %5 = arith.addf %2, %4 : vector<8x128xf32>
    %cst_5 = arith.constant 0.000000e+00 : f32
    %6 = vector.broadcast %cst_5 : f32 to vector<8x128xf32>
    %7 = arith.maximumf %5, %6 : vector<8x128xf32>
    %8 = arith.truncf %7 : vector<8x128xf32> to vector<8x128xbf16>
    %c0_6 = arith.constant 0 : index
    %c0_7 = arith.constant 0 : index
    %9 = vector.load %arg4[%c0_6, %c0_7] : memref<128x128xbf16, #tpu.memory_space<vmem>>, vector<128x128xbf16>
    %cst_8 = arith.constant dense<0.000000e+00> : vector<8x128xf32>
    %10 = tpu.matmul %8, %9, %cst_8 {dimension_numbers = #tpu.dot_dimension_numbers<[1], [0], [0], [1], [0, 0, 1, 1], [], []>} : vector<8x128xbf16>, vector<128x128xbf16>, vector<8x128xf32> -> vector<8x128xf32>
    %c0_9 = arith.constant 0 : index
    %c0_10 = arith.constant 0 : index
    %11 = vector.load %arg5[%c0_9, %c0_10] : memref<1x128xf32, #tpu.memory_space<vmem>>, vector<1x128xf32>
    %12 = vector.broadcast %11 : vector<1x128xf32> to vector<8x128xf32>
    %13 = arith.addf %10, %12 : vector<8x128xf32>
    %cst_11 = arith.constant 0.000000e+00 : f32
    %14 = vector.broadcast %cst_11 : f32 to vector<8x128xf32>
    %15 = arith.maximumf %13, %14 : vector<8x128xf32>
    %16 = arith.truncf %15 : vector<8x128xf32> to vector<8x128xbf16>
    %c0_12 = arith.constant 0 : index
    %c0_13 = arith.constant 0 : index
    %17 = vector.load %arg6[%c0_12, %c0_13] : memref<128x128xbf16, #tpu.memory_space<vmem>>, vector<128x128xbf16>
    %cst_14 = arith.constant dense<0.000000e+00> : vector<8x128xf32>
    %18 = tpu.matmul %16, %17, %cst_14 {dimension_numbers = #tpu.dot_dimension_numbers<[1], [0], [0], [1], [0, 0, 1, 1], [], []>} : vector<8x128xbf16>, vector<128x128xbf16>, vector<8x128xf32> -> vector<8x128xf32>
    %c0_15 = arith.constant 0 : index
    %c0_16 = arith.constant 0 : index
    %19 = vector.load %arg7[%c0_15, %c0_16] : memref<1x128xf32, #tpu.memory_space<vmem>>, vector<1x128xf32>
    %20 = vector.broadcast %19 : vector<1x128xf32> to vector<8x128xf32>
    %21 = arith.addf %18, %20 : vector<8x128xf32>
    %22 = tpu.iota {dimensions = array<i32: 1>} : vector<8x128xi32>
    %c0_i32 = arith.constant 0 : i32
    %23 = vector.broadcast %c0_i32 : i32 to vector<8x128xi32>
    %24 = arith.cmpi eq, %22, %23 : vector<8x128xi32>
    %cst_17 = arith.constant 2.000000e+00 : f32
    %cst_18 = arith.constant 1.000000e+00 : f32
    %25 = vector.broadcast %cst_17 : f32 to vector<8x128xf32>
    %26 = vector.broadcast %cst_18 : f32 to vector<8x128xf32>
    %27 = arith.select %24, %25, %26 : vector<8x128xi1>, vector<8x128xf32>
    %c2_i32 = arith.constant 2 : i32
    %28 = vector.broadcast %c2_i32 : i32 to vector<8x128xi32>
    %29 = arith.cmpi slt, %22, %28 : vector<8x128xi32>
    %30 = math.tanh %21 : vector<8x128xf32>
    %31 = arith.mulf %30, %27 : vector<8x128xf32>
    %32 = arith.select %29, %31, %21 : vector<8x128xi1>, vector<8x128xf32>
    %c0_19 = arith.constant 0 : index
    %c0_20 = arith.constant 0 : index
    %33 = vector.load %arg8[%c0_19, %c0_20] : memref<8x128xf32, #tpu.memory_space<vmem>>, vector<8x128xf32>
    tpu.vector_store %arg8[%c0_19, %c0_20], %32 {strides = array<i32>} : memref<8x128xf32, #tpu.memory_space<vmem>>, vector<8x128xf32>,
    return
  }
  func.func @transform_0(%arg0: i32) -> (i32, i32) {
    %c0_i32 = arith.constant 0 : i32
    %c0_i32_0 = arith.constant 0 : i32
    return %arg0, %c0_i32 : i32, i32
  }
  func.func @transform_1(%arg0: i32) -> (i32, i32) {
    %c0_i32 = arith.constant 0 : i32
    %c0_i32_0 = arith.constant 0 : i32
    %c0_i32_1 = arith.constant 0 : i32
    return %c0_i32, %c0_i32_0 : i32, i32
  }
  func.func @transform_2(%arg0: i32) -> (i32, i32) {
    %c0_i32 = arith.constant 0 : i32
    %c0_i32_0 = arith.constant 0 : i32
    %c0_i32_1 = arith.constant 0 : i32
    return %c0_i32, %c0_i32_0 : i32, i32
  }
  func.func @transform_3(%arg0: i32) -> (i32, i32) {
    %c0_i32 = arith.constant 0 : i32
    %c0_i32_0 = arith.constant 0 : i32
    %c0_i32_1 = arith.constant 0 : i32
    return %c0_i32, %c0_i32_0 : i32, i32
  }
  func.func @transform_4(%arg0: i32) -> (i32, i32) {
    %c0_i32 = arith.constant 0 : i32
    %c0_i32_0 = arith.constant 0 : i32
    %c0_i32_1 = arith.constant 0 : i32
    return %c0_i32, %c0_i32_0 : i32, i32
  }
  func.func @transform_5(%arg0: i32) -> (i32, i32) {
    %c0_i32 = arith.constant 0 : i32
    %c0_i32_0 = arith.constant 0 : i32
    %c0_i32_1 = arith.constant 0 : i32
    return %c0_i32, %c0_i32_0 : i32, i32
  }
  func.func @transform_6(%arg0: i32) -> (i32, i32) {
    %c0_i32 = arith.constant 0 : i32
    %c0_i32_0 = arith.constant 0 : i32
    %c0_i32_1 = arith.constant 0 : i32
    return %c0_i32, %c0_i32_0 : i32, i32
  }
  func.func @transform_7(%arg0: i32) -> (i32, i32) {
    %c0_i32 = arith.constant 0 : i32
    %c0_i32_0 = arith.constant 0 : i32
    return %arg0, %c0_i32 : i32, i32
  }
}

</mosaic_0001>

<llo_original>
// kernel: gaussian_policy_forward.1
$region0: #{gaussian_policy_forward.1}
  #allocation0 [shape = 'u32[]', space=smem, size = 0x4, offset = 0x4, fixed_abs, tag = 'smem constant byte address 0x4 - core index']
  #allocation1 [shape = 'u32[72,128]{1,0:T(1,128)}', space=vmem, size = 0x9000, scoped, tag = 'internal scratch']
  %s0 = inlined_call_operand.vmem [shape: bf16[8,128], index: 0, kind: input, shape index: {}]
  %s1 = inlined_call_operand.hbm [shape: bf16[128,128], index: 1, kind: input, shape index: {}]
  %s2 = inlined_call_operand.vmem [shape: f32[1,128], index: 2, kind: input, shape index: {}]
  %s3 = inlined_call_operand.hbm [shape: bf16[128,128], index: 3, kind: input, shape index: {}]
  %s4 = inlined_call_operand.vmem [shape: f32[1,128], index: 4, kind: input, shape index: {}]
  %s5 = inlined_call_operand.hbm [shape: bf16[128,128], index: 5, kind: input, shape index: {}]
  %s6 = inlined_call_operand.vmem [shape: f32[1,128], index: 6, kind: input, shape index: {}]
  %s7 = inlined_call_operand.hbm [shape: f32[8,128], index: 7, kind: output, shape index: {}]
  %s8 = sld [smem:[#allocation0]]
  $region50: #{gaussian_policy_forward.1} parent=0
    _
  %s10 = ssub.s32 1, %s8
  %s11 = scalar_select 0, %s10, %s8
  $region1: #{gaussian_policy_forward.1} parent=0
    #allocation2 [shape = 'u8[32768]{0}', space=vmem, size = 0x8000, scoped, tag = 'input window, operand 1, single buffered']
    #allocation3 [shape = 's32[1]{0}', space=sflag, size = 0x4, scoped, tag = 'scoped memory for gaussian_policy_forward.1']
    #allocation4 [shape = 's32[1]{0}', space=sflag, size = 0x4, scoped, tag = 'scoped memory for gaussian_policy_forward.1']
    #allocation5 [shape = 'u8[32768]{0}', space=vmem, size = 0x8000, scoped, tag = 'input window, operand 3, single buffered']
    #allocation6 [shape = 's32[1]{0}', space=sflag, size = 0x4, scoped, tag = 'scoped memory for gaussian_policy_forward.1']
    #allocation7 [shape = 'u8[32768]{0}', space=vmem, size = 0x8000, scoped, tag = 'input window, operand 5, single buffered']
    #allocation8 [shape = 'u8[4096]{0}', space=vmem, size = 0x1000, scoped, tag = 'output window, operand 0, single buffered']
    %12 = vsyncpa [#allocation3], 0
    %13 = vsyncpa [#allocation6], 0
    %14 = vsyncpa [#allocation4], 0
    // Predicated region
    $region2: #{gaussian_policy_forward.1} parent=1 // pred_check
      _
    $region3: #{gaussian_policy_forward.1} parent=1 // pred_check_branch
      %16 = sbr.rel (0) target = $region5
    $region4: #{gaussian_policy_forward.1} parent=1 // pred_region
      _
    $region5: #{gaussian_policy_forward.1} parent=1 // pred_fallthru
      _
    // Predicated region
    $region6: #{gaussian_policy_forward.1} parent=1 // pred_check
      _
    $region7: #{gaussian_policy_forward.1} parent=1 // pred_check_branch
      %18 = sbr.rel (0) target = $region9
    $region8: #{gaussian_policy_forward.1} parent=1 // pred_region
      %20 = vsyncadd [#allocation3], 0
      %s21 = sshll.u32 %s1, 4
      %s22 = int_to_ptr.hbm [resolvable:$true] %s21
      %s23 = sshll.u32 [#allocation2], 4
      %s24 = int_to_ptr.vmem [resolvable:$true] %s23
      %29 = dma.hbm_to_vmem [thread:$0]  %s22, 1024, %s24, [#allocation3], 64, 64, 4
    $region9: #{gaussian_policy_forward.1} parent=1 // pred_fallthru
      _
    // Predicated region
    $region10: #{gaussian_policy_forward.1} parent=1 // pred_check
      _
    $region11: #{gaussian_policy_forward.1} parent=1 // pred_check_branch
      %31 = sbr.rel (0) target = $region13
    $region12: #{gaussian_policy_forward.1} parent=1 // pred_region
      _
    $region13: #{gaussian_policy_forward.1} parent=1 // pred_fallthru
      _
    // Predicated region
    $region14: #{gaussian_policy_forward.1} parent=1 // pred_check
      _
    $region15: #{gaussian_policy_forward.1} parent=1 // pred_check_branch
      %33 = sbr.rel (0) target = $region17
    $region16: #{gaussian_policy_forward.1} parent=1 // pred_region
      %35 = vsyncadd [#allocation6], 0
      %s36 = sshll.u32 %s3, 4
      %s37 = int_to_ptr.hbm [resolvable:$true] %s36
      %s38 = sshll.u32 [#allocation5], 4
      %s39 = int_to_ptr.vmem [resolvable:$true] %s38
      %44 = dma.hbm_to_vmem [thread:$0]  %s37, 1024, %s39, [#allocation6], 64, 64, 4
    $region17: #{gaussian_policy_forward.1} parent=1 // pred_fallthru
      _
    // Predicated region
    $region18: #{gaussian_policy_forward.1} parent=1 // pred_check
      _
    $region19: #{gaussian_policy_forward.1} parent=1 // pred_check_branch
      %46 = sbr.rel (0) target = $region21
    $region20: #{gaussian_policy_forward.1} parent=1 // pred_region
      _
    $region21: #{gaussian_policy_forward.1} parent=1 // pred_fallthru
      _
    // Predicated region
    $region22: #{gaussian_policy_forward.1} parent=1 // pred_check
      _
    $region23: #{gaussian_policy_forward.1} parent=1 // pred_check_branch
      %48 = sbr.rel (0) target = $region25
    $region24: #{gaussian_policy_forward.1} parent=1 // pred_region
      %50 = vsyncadd [#allocation6], 0
      %s51 = sshll.u32 %s5, 4
      %s52 = int_to_ptr.hbm [resolvable:$true] %s51
      %s53 = sshll.u32 [#allocation7], 4
      %s54 = int_to_ptr.vmem [resolvable:$true] %s53
      %59 = dma.hbm_to_vmem [thread:$0]  %s52, 1024, %s54, [#allocation6], 64, 64, 4
    $region25: #{gaussian_policy_forward.1} parent=1 // pred_fallthru
      _
    // Predicated region
    $region26: #{gaussian_policy_forward.1} parent=1 // pred_check
      _
    $region27: #{gaussian_policy_forward.1} parent=1 // pred_check_branch
      %61 = sbr.rel (0) target = $region29
    $region28: #{gaussian_policy_forward.1} parent=1 // pred_region
      _
    $region29: #{gaussian_policy_forward.1} parent=1 // pred_fallthru
      _
    // Predicated region
    $region30: #{gaussian_policy_forward.1} parent=1 // pred_check
      _
    $region31: #{gaussian_policy_forward.1} parent=1 // pred_check_branch
      %63 = sbr.rel (0) target = $region33
    $region32: #{gaussian_policy_forward.1} parent=1 // pred_region
      %65 = dma.done [#allocation3], 1024
    $region33: #{gaussian_policy_forward.1} parent=1 // pred_fallthru
      _
    // Predicated region
    $region34: #{gaussian_policy_forward.1} parent=1 // pred_check
      _
    $region35: #{gaussian_policy_forward.1} parent=1 // pred_check_branch
      %67 = sbr.rel (0) target = $region37
    $region36: #{gaussian_policy_forward.1} parent=1 // pred_region
      %69 = dma.done [#allocation6], 1024
    $region37: #{gaussian_policy_forward.1} parent=1 // pred_fallthru
      _
    // Predicated region
    $region38: #{gaussian_policy_forward.1} parent=1 // pred_check
      _
    $region39: #{gaussian_policy_forward.1} parent=1 // pred_check_branch
      %71 = sbr.rel (0) target = $region41
    $region40: #{gaussian_policy_forward.1} parent=1 // pred_region
      %73 = dma.done [#allocation6], 1024
    $region41: #{gaussian_policy_forward.1} parent=1 // pred_fallthru
      _
    %v74 = vld [vmem:[%s0] sm:$0xf]
    %v75 = vld [vmem:[#allocation2] sm:$0xf]
    %v76 = vld [vmem:[#allocation2 + $0x4] sm:$0xf]
    %v77 = vld [vmem:[#allocation2 + $0x8] sm:$0xf]
    %v78 = vld [vmem:[#allocation2 + $0xc] sm:$0xf]
    %v79 = vld [vmem:[#allocation2 + $0x10] sm:$0xf]
    %v80 = vld [vmem:[#allocation2 + $0x14] sm:$0xf]
    %v81 = vld [vmem:[#allocation2 + $0x18] sm:$0xf]
    %v82 = vld [vmem:[#allocation2 + $0x1c] sm:$0xf]
    %v83 = vld [vmem:[#allocation2 + $0x20] sm:$0xf]
    %v84 = vld [vmem:[#allocation2 + $0x24] sm:$0xf]
    %v85 = vld [vmem:[#allocation2 + $0x28] sm:$0xf]
    %v86 = vld [vmem:[#allocation2 + $0x2c] sm:$0xf]
    %v87 = vld [vmem:[#allocation2 + $0x30] sm:$0xf]
    %v88 = vld [vmem:[#allocation2 + $0x34] sm:$0xf]
    %v89 = vld [vmem:[#allocation2 + $0x38] sm:$0xf]
    %v90 = vld [vmem:[#allocation2 + $0x3c] sm:$0xf]
    %v91 = vld [vmem:[%s2] sm:$0x1]
    %v93 = vperm.slane %v91, 0
    %v111 = vunpack.c.l.b16 %v75
    %v112 = vunpack.c.l.b16 %v76
    %v113 = vunpack.c.l.b16 %v77
    %v114 = vunpack.c.l.b16 %v78
    %v115 = vunpack.c.l.b16 %v79
    %v116 = vunpack.c.l.b16 %v80
    %v117 = vunpack.c.l.b16 %v81
    %v118 = vunpack.c.l.b16 %v82
    %v119 = vunpack.c.l.b16 %v83
    %v120 = vunpack.c.l.b16 %v84
    %v121 = vunpack.c.l.b16 %v85
    %v122 = vunpack.c.l.b16 %v86
    %v123 = vunpack.c.l.b16 %v87
    %v124 = vunpack.c.l.b16 %v88
    %v125 = vunpack.c.l.b16 %v89
    %v126 = vunpack.c.l.b16 %v90
    %v127 = vpack.c.b16 %v112, %v111
    %v128 = vpack.c.b16 %v114, %v113
    %v129 = vpack.c.b16 %v116, %v115
    %v130 = vpack.c.b16 %v118, %v117
    %v131 = vpack.c.b16 %v120, %v119
    %v132 = vpack.c.b16 %v122, %v121
    %v133 = vpack.c.b16 %v124, %v123
    %v134 = vpack.c.b16 %v126, %v125
    %143 = vmatpush.bf16.msra.mxu0 %v134
    %144 = vmatpush.bf16.msra.mxu0 %v133
    %145 = vmatpush.bf16.msra.mxu0 %v132
    %146 = vmatpush.bf16.msra.mxu0 %v131
    %147 = vmatpush.bf16.msra.mxu0 %v130
    %148 = vmatpush.bf16.msra.mxu0 %v129
    %149 = vmatpush.bf16.msra.mxu0 %v128
    %150 = vmatpush.bf16.msra.mxu0 %v127
    %151 = vmatmul.bf16.gmra.mxu0 %v74
    %v152 = vpop.f32.mrf.mxu0
    %v153 = vadd.f32 %v93, %v152
    %v154 = vpop.f32.mrf.mxu0
    %155 = vdwg.mxu0
    %v156 = vmax.f32 %v153, 0.0
    %v157 = vpack.c.bf16 %v156, %v156
    %v158 = vld [vmem:[#allocation5] sm:$0xf]
    %v159 = vld [vmem:[#allocation5 + $0x4] sm:$0xf]
    %v160 = vld [vmem:[#allocation5 + $0x8] sm:$0xf]
    %v161 = vld [vmem:[#allocation5 + $0xc] sm:$0xf]
    %v162 = vld [vmem:[#allocation5 + $0x10] sm:$0xf]
    %v163 = vld [vmem:[#allocation5 + $0x14] sm:$0xf]
    %v164 = vld [vmem:[#allocation5 + $0x18] sm:$0xf]
    %v165 = vld [vmem:[#allocation5 + $0x1c] sm:$0xf]
    %v166 = vld [vmem:[#allocation5 + $0x20] sm:$0xf]
    %v167 = vld [vmem:[#allocation5 + $0x24] sm:$0xf]
    %v168 = vld [vmem:[#allocation5 + $0x28] sm:$0xf]
    %v169 = vld [vmem:[#allocation5 + $0x2c] sm:$0xf]
    %v170 = vld [vmem:[#allocation5 + $0x30] sm:$0xf]
    %v171 = vld [vmem:[#allocation5 + $0x34] sm:$0xf]
    %v172 = vld [vmem:[#allocation5 + $0x38] sm:$0xf]
    %v173 = vld [vmem:[#allocation5 + $0x3c] sm:$0xf]
    %v174 = vld [vmem:[%s4] sm:$0x1]
    %v176 = vperm.slane %v174, 0
    %v194 = vunpack.c.l.b16 %v158
    %v195 = vunpack.c.l.b16 %v159
    %v196 = vunpack.c.l.b16 %v160
    %v197 = vunpack.c.l.b16 %v161
    %v198 = vunpack.c.l.b16 %v162
    %v199 = vunpack.c.l.b16 %v163
    %v200 = vunpack.c.l.b16 %v164
    %v201 = vunpack.c.l.b16 %v165
    %v202 = vunpack.c.l.b16 %v166
    %v203 = vunpack.c.l.b16 %v167
    %v204 = vunpack.c.l.b16 %v168
    %v205 = vunpack.c.l.b16 %v169
    %v206 = vunpack.c.l.b16 %v170
    %v207 = vunpack.c.l.b16 %v171
    %v208 = vunpack.c.l.b16 %v172
    %v209 = vunpack.c.l.b16 %v173
    %v210 = vpack.c.b16 %v195, %v194
    %v211 = vpack.c.b16 %v197, %v196
    %v212 = vpack.c.b16 %v199, %v198
    %v213 = vpack.c.b16 %v201, %v200
    %v214 = vpack.c.b16 %v203, %v202
    %v215 = vpack.c.b16 %v205, %v204
    %v216 = vpack.c.b16 %v207, %v206
    %v217 = vpack.c.b16 %v209, %v208
    %226 = vmatpush.bf16.msra.mxu0 %v217
    %227 = vmatpush.bf16.msra.mxu0 %v216
    %228 = vmatpush.bf16.msra.mxu0 %v215
    %229 = vmatpush.bf16.msra.mxu0 %v214
    %230 = vmatpush.bf16.msra.mxu0 %v213
    %231 = vmatpush.bf16.msra.mxu0 %v212
    %232 = vmatpush.bf16.msra.mxu0 %v211
    %233 = vmatpush.bf16.msra.mxu0 %v210
    %234 = vmatmul.bf16.gmra.mxu0 %v157
    %v235 = vpop.f32.mrf.mxu0
    %v236 = vadd.f32 %v176, %v235
    %v237 = vpop.f32.mrf.mxu0
    %238 = vdwg.mxu0
    %v239 = vmax.f32 %v236, 0.0
    %v240 = vpack.c.bf16 %v239, %v239
    %v241 = vld [vmem:[#allocation7] sm:$0xf]
    %v242 = vld [vmem:[#allocation7 + $0x4] sm:$0xf]
    %v243 = vld [vmem:[#allocation7 + $0x8] sm:$0xf]
    %v244 = vld [vmem:[#allocation7 + $0xc] sm:$0xf]
    %v245 = vld [vmem:[#allocation7 + $0x10] sm:$0xf]
    %v246 = vld [vmem:[#allocation7 + $0x14] sm:$0xf]
    %v247 = vld [vmem:[#allocation7 + $0x18] sm:$0xf]
    %v248 = vld [vmem:[#allocation7 + $0x1c] sm:$0xf]
    %v249 = vld [vmem:[#allocation7 + $0x20] sm:$0xf]
    %v250 = vld [vmem:[#allocation7 + $0x24] sm:$0xf]
    %v251 = vld [vmem:[#allocation7 + $0x28] sm:$0xf]
    %v252 = vld [vmem:[#allocation7 + $0x2c] sm:$0xf]
    %v253 = vld [vmem:[#allocation7 + $0x30] sm:$0xf]
    %v254 = vld [vmem:[#allocation7 + $0x34] sm:$0xf]
    %v255 = vld [vmem:[#allocation7 + $0x38] sm:$0xf]
    %v256 = vld [vmem:[#allocation7 + $0x3c] sm:$0xf]
    %v257 = vld [vmem:[%s6] sm:$0x1]
    %v259 = vperm.slane %v257, 0
    %v277 = vunpack.c.l.b16 %v241
    %v278 = vunpack.c.l.b16 %v242
    %v279 = vunpack.c.l.b16 %v243
    %v280 = vunpack.c.l.b16 %v244
    %v281 = vunpack.c.l.b16 %v245
    %v282 = vunpack.c.l.b16 %v246
    %v283 = vunpack.c.l.b16 %v247
    %v284 = vunpack.c.l.b16 %v248
    %v285 = vunpack.c.l.b16 %v249
    %v286 = vunpack.c.l.b16 %v250
    %v287 = vunpack.c.l.b16 %v251
    %v288 = vunpack.c.l.b16 %v252
    %v289 = vunpack.c.l.b16 %v253
    %v290 = vunpack.c.l.b16 %v254
    %v291 = vunpack.c.l.b16 %v255
    %v292 = vunpack.c.l.b16 %v256
    %v293 = vpack.c.b16 %v278, %v277
    %v294 = vpack.c.b16 %v280, %v279
    %v295 = vpack.c.b16 %v282, %v281
    %v296 = vpack.c.b16 %v284, %v283
    %v297 = vpack.c.b16 %v286, %v285
    %v298 = vpack.c.b16 %v288, %v287
    %v299 = vpack.c.b16 %v290, %v289
    %v300 = vpack.c.b16 %v292, %v291
    %309 = vmatpush.bf16.msra.mxu0 %v300
    %310 = vmatpush.bf16.msra.mxu0 %v299
    %311 = vmatpush.bf16.msra.mxu0 %v298
    %312 = vmatpush.bf16.msra.mxu0 %v297
    %313 = vmatpush.bf16.msra.mxu0 %v296
    %314 = vmatpush.bf16.msra.mxu0 %v295
    %315 = vmatpush.bf16.msra.mxu0 %v294
    %316 = vmatpush.bf16.msra.mxu0 %v293
    %317 = vmatmul.bf16.gmra.mxu0 %v240
    %v318 = vpop.f32.mrf.mxu0
    %v319 = vadd.f32 %v259, %v318
    %v320 = vpop.f32.mrf.mxu0
    %321 = vdwg.mxu0
    %v322 = vlaneseq
    %v323 = vand.u32 %v322, 127
    %vm324 = vcmp.eq.s32.totalorder %v323, 0
    %v325 = vsel %vm324, 2.0, 1.0
    %vm326 = vcmp.lt.s32.totalorder %v323, 2
    %v327 = vtanh.pop %v319
    %v328 = vmul.f32 %v327, %v325
    %v329 = vsel %vm326, %v328, %v319
    %330 = vst [vmem:[#allocation8] sm:$0xff] %v329
    // Predicated region
    $region42: #{gaussian_policy_forward.1} parent=1 // pred_check
      _
    $region43: #{gaussian_policy_forward.1} parent=1 // pred_check_branch
      %332 = sbr.rel (0) target = $region45
    $region44: #{gaussian_policy_forward.1} parent=1 // pred_region
      %334 = vsyncadd [#allocation4], 0
      %s336 = sshll.u32 [#allocation8], 4
      %s337 = int_to_ptr.vmem [resolvable:$true] %s336
      %s338 = sshll.u32 %s7, 4
      %s339 = int_to_ptr.hbm [resolvable:$true] %s338
      %341 = dma.vmem_to_hbm [thread:$0]  %s337, 128, %s339, [#allocation4]
    $region45: #{gaussian_policy_forward.1} parent=1 // pred_fallthru
      _
    // Predicated region
    $region46: #{gaussian_policy_forward.1} parent=1 // pred_check
      _
    $region47: #{gaussian_policy_forward.1} parent=1 // pred_check_branch
      %343 = sbr.rel (0) target = $region49
    $region48: #{gaussian_policy_forward.1} parent=1 // pred_region
      %345 = dma.done [#allocation4], 128
    $region49: #{gaussian_policy_forward.1} parent=1 // pred_fallthru
      _
    %346 = vsyncpa [#allocation3], 1
    %347 = vsyncpa [#allocation6], 1
    %348 = vsyncpa [#allocation4], 1

</llo_original>
